<compile_context>
chip_gen: v7x
topology: tpu7x:2x2x1
jax: 0.10.0
libtpu: 0.0.40
codegen_flags: <defaults>
</compile_context>

<pallas_src>
import jax
import jax.numpy as jnp
from jax.experimental import pallas as pl
from jax.experimental.pallas import tpu as pltpu

_LANE = 128
_SUBLANE = 8


def _round_up(x, m):
    return ((x + m - 1) // m) * m


def _mlp_kernel(x_ref, w1_ref, b1_ref, w2_ref, b2_ref, w3_ref, b3_ref, o_ref):
    x = x_ref[...].astype(jnp.float32)
    w1 = w1_ref[...].astype(jnp.float32)
    w2 = w2_ref[...].astype(jnp.float32)
    w3 = w3_ref[...].astype(jnp.float32)

    h1 = jnp.dot(x, w1, preferred_element_type=jnp.float32) + b1_ref[...]
    h1 = jnp.maximum(h1, 0.0)
    h2 = jnp.dot(h1, w2, preferred_element_type=jnp.float32) + b2_ref[...]
    h2 = jnp.maximum(h2, 0.0)
    out = jnp.dot(h2, w3, preferred_element_type=jnp.float32) + b3_ref[...]
    o_ref[...] = out.astype(o_ref.dtype)


def _choose_block_b(Bp, requested):
    """Batch tile: multiple of 8, <= Bp, >= 2 grid steps once B is non-trivial."""
    if requested is None:
        requested = 2048  # sweep 1024-8192 on real workloads
    bb = _round_up(min(requested, Bp), _SUBLANE)
    if Bp > _SUBLANE:
        # Guarantee >= 2 grid iterations so megacore sharding (v7x) and the
        # software pipeline have something to overlap.
        bb = min(bb, _round_up(pl.cdiv(Bp, 2), _SUBLANE))
    return max(bb, _SUBLANE)


def _vmem_estimate(bb, in_dim, hid, out_dim):
    """Lane-padded VMEM footprint estimate (bytes, f32)."""
    def padded(r, c):
        return _round_up(r, _SUBLANE) * _round_up(c, _LANE) * 4

    return (2 * padded(bb, in_dim)                 # x double-buffer
            + 2 * padded(bb, out_dim)              # output double-buffer
            + 3 * padded(bb, hid)                  # live f32 intermediates
            + 2 * (padded(in_dim, hid) + padded(hid, hid) + padded(hid, out_dim))
            + 2 * (2 * padded(1, hid) + padded(1, out_dim)))


def intention_prediction_forward(x, params, *, block_b=None):
    """x: (B, input_size).  params: w1,b1,w2,b2,w3,b3 with w stored as (in, out)."""
    B, in_dim = x.shape
    hid = params["w1"].shape[1]
    out_dim = params["w3"].shape[1]

    # Pad the batch only up to a sublane multiple (<= 7 rows) and only if needed.
    if B % _SUBLANE:
        Bp = _round_up(B, _SUBLANE)
        x_in = jnp.pad(x, ((0, Bp - B), (0, 0)))
    else:
        Bp = B
        x_in = x

    bb = _choose_block_b(Bp, block_b)
    grid = (pl.cdiv(Bp, bb),)

    vmem_limit = int(min(max(2 * _vmem_estimate(bb, in_dim, hid, out_dim),
                             16 * 1024 * 1024),
                         48 * 1024 * 1024))

    out = pl.pallas_call(
        _mlp_kernel,
        out_shape=jax.ShapeDtypeStruct((Bp, out_dim), jnp.float32),
        grid=grid,
        in_specs=[
            pl.BlockSpec((bb, in_dim), lambda i: (i, 0)),       # x tile (streamed)
            pl.BlockSpec((in_dim, hid), lambda i: (0, 0)),      # w1 (resident)
            pl.BlockSpec((1, hid), lambda i: (0, 0)),           # b1
            pl.BlockSpec((hid, hid), lambda i: (0, 0)),         # w2
            pl.BlockSpec((1, hid), lambda i: (0, 0)),           # b2
            pl.BlockSpec((hid, out_dim), lambda i: (0, 0)),     # w3
            pl.BlockSpec((1, out_dim), lambda i: (0, 0)),       # b3
        ],
        out_specs=pl.BlockSpec((bb, out_dim), lambda i: (i, 0)),
        compiler_params=pltpu.CompilerParams(
            dimension_semantics=("parallel",),
            vmem_limit_bytes=vmem_limit,
        ),
    )(x_in, params["w1"], params["b1"], params["w2"], params["b2"],
      params["w3"], params["b3"])

    if Bp != B:
        out = out[:B]
    return out


def init_params(key, input_size, hidden_size, output_size):
    """Deterministic init mirroring nn.Linear shapes (weights stored transposed)."""
    ks = jax.random.split(key, 6)

    def linear(kw, kb, fan_in, fan_out):
        bound = 1.0 / (fan_in ** 0.5)
        # PyTorch Linear weight is (out, in); we store its transpose (in, out).
        w = jax.random.uniform(kw, (fan_in, fan_out), jnp.float32, -bound, bound)
        b = jax.random.uniform(kb, (1, fan_out), jnp.float32, -bound, bound)
        return w, b

    w1, b1 = linear(ks[0], ks[1], input_size, hidden_size)
    w2, b2 = linear(ks[2], ks[3], hidden_size, hidden_size)
    w3, b3 = linear(ks[4], ks[5], hidden_size, output_size)
    return dict(w1=w1, b1=b1, w2=w2, b2=b2, w3=w3, b3=b3)


def reference_forward(x, p):
    """Pure-JAX f32 reference (mirrors the PyTorch forward)."""
    h1 = jnp.maximum(jnp.dot(x, p["w1"]) + p["b1"], 0.0)
    h2 = jnp.maximum(jnp.dot(h1, p["w2"]) + p["b2"], 0.0)
    return jnp.dot(h2, p["w3"]) + p["b3"]


if __name__ == "__main__":
    key = jax.random.PRNGKey(0)
    kx, kp = jax.random.split(key)

    batch, input_size, hidden_size, output_size = 8, 16, 32, 4
    x = jax.random.normal(kx, (batch, input_size), jnp.float32)
    params = init_params(kp, input_size, hidden_size, output_size)

    out = jax.block_until_ready(intention_prediction_forward(x, params))
    ref = reference_forward(x, params)

    assert out.shape == (batch, output_size), out.shape
    assert jnp.allclose(out, ref, atol=1e-4, rtol=1e-4), "kernel/reference mismatch"

    # Also exercise a batch that is not a multiple of the tile (ragged grid path).
    x2 = jax.random.normal(kx, (13, input_size), jnp.float32)
    out2 = jax.block_until_ready(
        intention_prediction_forward(x2, params, block_b=8))
    ref2 = reference_forward(x2, params)
    assert out2.shape == (13, output_size), out2.shape
    assert jnp.allclose(out2, ref2, atol=1e-4, rtol=1e-4), "ragged batch mismatch"

    print("KERNEL_OK")
</pallas_src>

<mosaic_0001>
module attributes {stable_mosaic.version = 11 : i64} {
  func.func @_mlp_kernel(%arg0: i32, %arg1: memref<8x16xf32, #tpu.memory_space<vmem>>, %arg2: memref<16x32xf32, #tpu.memory_space<vmem>>, %arg3: memref<1x32xf32, #tpu.memory_space<vmem>>, %arg4: memref<32x32xf32, #tpu.memory_space<vmem>>, %arg5: memref<1x32xf32, #tpu.memory_space<vmem>>, %arg6: memref<32x4xf32, #tpu.memory_space<vmem>>, %arg7: memref<1x4xf32, #tpu.memory_space<vmem>>, %arg8: memref<8x4xf32, #tpu.memory_space<vmem>>) attributes {dimension_semantics = [#tpu.dimension_semantics<parallel>], iteration_bounds = array<i64: 1>, scalar_prefetch = 0 : i64, scratch_operands = 0 : i64, tpu.core_type = #tpu.core_type<tc>, window_params = [{transform_indices = @transform_0, window_bounds = array<i64: 8, 16>}, {pipeline_mode = #tpu.pipeline_mode<synchronous>, transform_indices = @transform_1, window_bounds = array<i64: 16, 32>}, {pipeline_mode = #tpu.pipeline_mode<synchronous>, transform_indices = @transform_2, window_bounds = array<i64: 1, 32>}, {pipeline_mode = #tpu.pipeline_mode<synchronous>, transform_indices = @transform_3, window_bounds = array<i64: 32, 32>}, {pipeline_mode = #tpu.pipeline_mode<synchronous>, transform_indices = @transform_4, window_bounds = array<i64: 1, 32>}, {pipeline_mode = #tpu.pipeline_mode<synchronous>, transform_indices = @transform_5, window_bounds = array<i64: 32, 4>}, {pipeline_mode = #tpu.pipeline_mode<synchronous>, transform_indices = @transform_6, window_bounds = array<i64: 1, 4>}, {transform_indices = @transform_7, window_bounds = array<i64: 8, 4>}]} {
    %c0 = arith.constant 0 : index
    %c0_0 = arith.constant 0 : index
    %0 = vector.load %arg1[%c0, %c0_0] : memref<8x16xf32, #tpu.memory_space<vmem>>, vector<8x16xf32>
    %c0_1 = arith.constant 0 : index
    %c0_2 = arith.constant 0 : index
    %1 = vector.load %arg2[%c0_1, %c0_2] : memref<16x32xf32, #tpu.memory_space<vmem>>, vector<16x32xf32>
    %c0_3 = arith.constant 0 : index
    %c0_4 = arith.constant 0 : index
    %2 = vector.load %arg4[%c0_3, %c0_4] : memref<32x32xf32, #tpu.memory_space<vmem>>, vector<32x32xf32>
    %c0_5 = arith.constant 0 : index
    %c0_6 = arith.constant 0 : index
    %3 = vector.load %arg6[%c0_5, %c0_6] : memref<32x4xf32, #tpu.memory_space<vmem>>, vector<32x4xf32>
    %cst = arith.constant dense<0.000000e+00> : vector<8x32xf32>
    %4 = tpu.matmul %0, %1, %cst {dimension_numbers = #tpu.dot_dimension_numbers<[1], [0], [0], [1], [0, 0, 1, 1], [], []>} : vector<8x16xf32>, vector<16x32xf32>, vector<8x32xf32> -> vector<8x32xf32>
    %c0_7 = arith.constant 0 : index
    %c0_8 = arith.constant 0 : index
    %5 = vector.load %arg3[%c0_7, %c0_8] : memref<1x32xf32, #tpu.memory_space<vmem>>, vector<1x32xf32>
    %6 = vector.broadcast %5 : vector<1x32xf32> to vector<8x32xf32>
    %7 = arith.addf %4, %6 : vector<8x32xf32>
    %cst_9 = arith.constant 0.000000e+00 : f32
    %8 = vector.broadcast %cst_9 : f32 to vector<8x32xf32>
    %9 = arith.maximumf %7, %8 : vector<8x32xf32>
    %cst_10 = arith.constant dense<0.000000e+00> : vector<8x32xf32>
    %10 = tpu.matmul %9, %2, %cst_10 {dimension_numbers = #tpu.dot_dimension_numbers<[1], [0], [0], [1], [0, 0, 1, 1], [], []>} : vector<8x32xf32>, vector<32x32xf32>, vector<8x32xf32> -> vector<8x32xf32>
    %c0_11 = arith.constant 0 : index
    %c0_12 = arith.constant 0 : index
    %11 = vector.load %arg5[%c0_11, %c0_12] : memref<1x32xf32, #tpu.memory_space<vmem>>, vector<1x32xf32>
    %12 = vector.broadcast %11 : vector<1x32xf32> to vector<8x32xf32>
    %13 = arith.addf %10, %12 : vector<8x32xf32>
    %cst_13 = arith.constant 0.000000e+00 : f32
    %14 = vector.broadcast %cst_13 : f32 to vector<8x32xf32>
    %15 = arith.maximumf %13, %14 : vector<8x32xf32>
    %cst_14 = arith.constant dense<0.000000e+00> : vector<8x4xf32>
    %16 = tpu.matmul %15, %3, %cst_14 {dimension_numbers = #tpu.dot_dimension_numbers<[1], [0], [0], [1], [0, 0, 1, 1], [], []>} : vector<8x32xf32>, vector<32x4xf32>, vector<8x4xf32> -> vector<8x4xf32>
    %c0_15 = arith.constant 0 : index
    %c0_16 = arith.constant 0 : index
    %17 = vector.load %arg7[%c0_15, %c0_16] : memref<1x4xf32, #tpu.memory_space<vmem>>, vector<1x4xf32>
    %18 = vector.broadcast %17 : vector<1x4xf32> to vector<8x4xf32>
    %19 = arith.addf %16, %18 : vector<8x4xf32>
    %c0_17 = arith.constant 0 : index
    %c0_18 = arith.constant 0 : index
    %20 = vector.load %arg8[%c0_17, %c0_18] : memref<8x4xf32, #tpu.memory_space<vmem>>, vector<8x4xf32>
    tpu.vector_store %arg8[%c0_17, %c0_18], %19 {strides = array<i32>} : memref<8x4xf32, #tpu.memory_space<vmem>>, vector<8x4xf32>,
    return
  }
  func.func @transform_0(%arg0: i32) -> (i32, i32) {
    %c0_i32 = arith.constant 0 : i32
    %c0_i32_0 = arith.constant 0 : i32
    return %arg0, %c0_i32 : i32, i32
  }
  func.func @transform_1(%arg0: i32) -> (i32, i32) {
    %c0_i32 = arith.constant 0 : i32
    %c0_i32_0 = arith.constant 0 : i32
    %c0_i32_1 = arith.constant 0 : i32
    return %c0_i32, %c0_i32_0 : i32, i32
  }
  func.func @transform_2(%arg0: i32) -> (i32, i32) {
    %c0_i32 = arith.constant 0 : i32
    %c0_i32_0 = arith.constant 0 : i32
    %c0_i32_1 = arith.constant 0 : i32
    return %c0_i32, %c0_i32_0 : i32, i32
  }
  func.func @transform_3(%arg0: i32) -> (i32, i32) {
    %c0_i32 = arith.constant 0 : i32
    %c0_i32_0 = arith.constant 0 : i32
    %c0_i32_1 = arith.constant 0 : i32
    return %c0_i32, %c0_i32_0 : i32, i32
  }
  func.func @transform_4(%arg0: i32) -> (i32, i32) {
    %c0_i32 = arith.constant 0 : i32
    %c0_i32_0 = arith.constant 0 : i32
    %c0_i32_1 = arith.constant 0 : i32
    return %c0_i32, %c0_i32_0 : i32, i32
  }
  func.func @transform_5(%arg0: i32) -> (i32, i32) {
    %c0_i32 = arith.constant 0 : i32
    %c0_i32_0 = arith.constant 0 : i32
    %c0_i32_1 = arith.constant 0 : i32
    return %c0_i32, %c0_i32_0 : i32, i32
  }
  func.func @transform_6(%arg0: i32) -> (i32, i32) {
    %c0_i32 = arith.constant 0 : i32
    %c0_i32_0 = arith.constant 0 : i32
    %c0_i32_1 = arith.constant 0 : i32
    return %c0_i32, %c0_i32_0 : i32, i32
  }
  func.func @transform_7(%arg0: i32) -> (i32, i32) {
    %c0_i32 = arith.constant 0 : i32
    %c0_i32_0 = arith.constant 0 : i32
    return %arg0, %c0_i32 : i32, i32
  }
}

</mosaic_0001>

<llo_original>
// kernel: tpu_custom_call.1
$region0: #{tpu_custom_call.1}
  #allocation0 [shape = 'u32[]', space=smem, size = 0x4, offset = 0x4, fixed_abs, tag = 'smem constant byte address 0x4 - core index']
  #allocation1 [shape = 'u32[144,128]{1,0:T(1,128)}', space=vmem, size = 0x12000, scoped, tag = 'internal scratch']
  %s0 = inlined_call_operand.vmem [shape: f32[8,16], index: 0, kind: input, shape index: {}]
  %s1 = inlined_call_operand.hbm [shape: f32[16,32], index: 1, kind: input, shape index: {}]
  %s2 = inlined_call_operand.vmem [shape: f32[1,32], index: 2, kind: input, shape index: {}]
  %s3 = inlined_call_operand.vmem [shape: f32[32,32], index: 3, kind: input, shape index: {}]
  %s4 = inlined_call_operand.vmem [shape: f32[1,32], index: 4, kind: input, shape index: {}]
  %s5 = inlined_call_operand.vmem [shape: f32[32,4], index: 5, kind: input, shape index: {}]
  %s6 = inlined_call_operand.vmem [shape: f32[1,4], index: 6, kind: input, shape index: {}]
  %s7 = inlined_call_operand.vmem [shape: f32[8,4], index: 7, kind: output, shape index: {}]
  %s8 = sld [smem:[#allocation0]]
  $region42: #{tpu_custom_call.1} parent=0
    _
  %s10 = ssub.s32 1, %s8
  %s11 = scalar_select 0, %s10, %s8
  $region1: #{tpu_custom_call.1} parent=0
    #allocation2 [shape = 'u8[8192]{0}', space=vmem, size = 0x2000, scoped, tag = 'input window, operand 1, single buffered']
    #allocation3 [shape = 's32[1]{0}', space=sflag, size = 0x4, scoped, tag = 'scoped memory for tpu_custom_call.1']
    %12 = vsyncpa [#allocation3], 0
    // Predicated region
    $region2: #{tpu_custom_call.1} parent=1 // pred_check
      _
    $region3: #{tpu_custom_call.1} parent=1 // pred_check_branch
      %14 = sbr.rel (0) target = $region5
    $region4: #{tpu_custom_call.1} parent=1 // pred_region
      _
    $region5: #{tpu_custom_call.1} parent=1 // pred_fallthru
      _
    // Predicated region
    $region6: #{tpu_custom_call.1} parent=1 // pred_check
      _
    $region7: #{tpu_custom_call.1} parent=1 // pred_check_branch
      %16 = sbr.rel (0) target = $region9
    $region8: #{tpu_custom_call.1} parent=1 // pred_region
      %s18 = ssub.s32 256, 256
      %19 = vsyncadd [#allocation3], %s18
      %s20 = sshll.u32 [#allocation2], 4
      %s21 = int_to_ptr.vmem [resolvable:$true] %s20
      %26 = dma.hbm_to_vmem [thread:$0]  %s1, 256, %s21, [#allocation3], 128, 128, 8
    $region9: #{tpu_custom_call.1} parent=1 // pred_fallthru
      _
    // Predicated region
    $region10: #{tpu_custom_call.1} parent=1 // pred_check
      _
    $region11: #{tpu_custom_call.1} parent=1 // pred_check_branch
      %28 = sbr.rel (0) target = $region13
    $region12: #{tpu_custom_call.1} parent=1 // pred_region
      _
    $region13: #{tpu_custom_call.1} parent=1 // pred_fallthru
      _
    // Predicated region
    $region14: #{tpu_custom_call.1} parent=1 // pred_check
      _
    $region15: #{tpu_custom_call.1} parent=1 // pred_check_branch
      %30 = sbr.rel (0) target = $region17
    $region16: #{tpu_custom_call.1} parent=1 // pred_region
      _
    $region17: #{tpu_custom_call.1} parent=1 // pred_fallthru
      _
    // Predicated region
    $region18: #{tpu_custom_call.1} parent=1 // pred_check
      _
    $region19: #{tpu_custom_call.1} parent=1 // pred_check_branch
      %32 = sbr.rel (0) target = $region21
    $region20: #{tpu_custom_call.1} parent=1 // pred_region
      _
    $region21: #{tpu_custom_call.1} parent=1 // pred_fallthru
      _
    // Predicated region
    $region22: #{tpu_custom_call.1} parent=1 // pred_check
      _
    $region23: #{tpu_custom_call.1} parent=1 // pred_check_branch
      %34 = sbr.rel (0) target = $region25
    $region24: #{tpu_custom_call.1} parent=1 // pred_region
      _
    $region25: #{tpu_custom_call.1} parent=1 // pred_fallthru
      _
    // Predicated region
    $region26: #{tpu_custom_call.1} parent=1 // pred_check
      _
    $region27: #{tpu_custom_call.1} parent=1 // pred_check_branch
      %36 = sbr.rel (0) target = $region29
    $region28: #{tpu_custom_call.1} parent=1 // pred_region
      _
    $region29: #{tpu_custom_call.1} parent=1 // pred_fallthru
      _
    // Predicated region
    $region30: #{tpu_custom_call.1} parent=1 // pred_check
      _
    $region31: #{tpu_custom_call.1} parent=1 // pred_check_branch
      %38 = sbr.rel (0) target = $region33
    $region32: #{tpu_custom_call.1} parent=1 // pred_region
      %39 = dma.done [#allocation3], 256
    $region33: #{tpu_custom_call.1} parent=1 // pred_fallthru
      _
    %v40 = vld [vmem:[%s0] sm:$0xff]
    %v41 = vld [vmem:[#allocation2] sm:$0xff]
    %v42 = vld [vmem:[#allocation2 + $0x8] sm:$0xff]
    %v43 = vld [vmem:[%s3] sm:$0xff]
    %v44 = vld [vmem:[%s3 + $0x8] sm:$0xff]
    %v45 = vld [vmem:[%s3 + $0x10] sm:$0xff]
    %v46 = vld [vmem:[%s3 + $0x18] sm:$0xff]
    %v47 = vld [vmem:[%s5] sm:$0xff]
    %v48 = vld [vmem:[%s5 + $0x8] sm:$0xff]
    %v49 = vld [vmem:[%s5 + $0x10] sm:$0xff]
    %v50 = vld [vmem:[%s5 + $0x18] sm:$0xff]
    %v51 = vld [vmem:[%s2] sm:$0x1]
    %v53 = vlaneseq
    %v54 = vshrl.u32 %v53, 7
    %v55 = vsub.s32 0, %v54
    %v56 = vrot.slane %v51, %v55
    %vm58 = vcmask 130048
    %v60 = vsel %vm58, %v40, 0
    %62 = vmatprep.subr.mxu0 0.0
    %63 = vmatpush1.msra.mxu0 %v41
    %64 = vmatprep.subr.mxu0 0.0
    %65 = vmatpush1.msra.mxu0 %v42
    %66 = vmatprep.subr.mxu0 0.0
    %67 = vmatpush1.msra.mxu0 0.0
    %68 = vmatprep.subr.mxu0 0.0
    %69 = vmatpush1.msra.mxu0 0.0
    %70 = vmatprep.subr.mxu0 0.0
    %71 = vmatpush1.msra.mxu0 0.0
    %72 = vmatprep.subr.mxu0 0.0
    %73 = vmatpush1.msra.mxu0 0.0
    %74 = vmatprep.subr.mxu0 0.0
    %75 = vmatpush1.msra.mxu0 0.0
    %76 = vmatprep.subr.mxu0 0.0
    %77 = vmatpush1.msra.mxu0 0.0
    %78 = vmatprep.subr.mxu0 0.0
    %79 = vmatpush1.msra.mxu0 0.0
    %80 = vmatprep.subr.mxu0 0.0
    %81 = vmatpush1.msra.mxu0 0.0
    %82 = vmatprep.subr.mxu0 0.0
    %83 = vmatpush1.msra.mxu0 0.0
    %84 = vmatprep.subr.mxu0 0.0
    %85 = vmatpush1.msra.mxu0 0.0
    %86 = vmatprep.subr.mxu0 0.0
    %87 = vmatpush1.msra.mxu0 0.0
    %88 = vmatprep.subr.mxu0 0.0
    %89 = vmatpush1.msra.mxu0 0.0
    %90 = vmatprep.subr.mxu0 0.0
    %91 = vmatpush1.msra.mxu0 0.0
    %92 = vmatprep.subr.mxu0 0.0
    %93 = vmatpush1.msra.mxu0 0.0
    %94 = vmatprep.subr.mxu0 0.0
    %95 = vmatpush1.msra.mxu0 0.0
    %96 = vmatprep.subr.mxu0 0.0
    %97 = vmatpush1.msra.mxu0 0.0
    %98 = vmatprep.subr.mxu0 0.0
    %99 = vmatpush1.msra.mxu0 0.0
    %100 = vmatprep.subr.mxu0 0.0
    %101 = vmatpush1.msra.mxu0 0.0
    %102 = vmatprep.subr.mxu0 0.0
    %103 = vmatpush1.msra.mxu0 0.0
    %104 = vmatprep.subr.mxu0 0.0
    %105 = vmatpush1.msra.mxu0 0.0
    %106 = vmatprep.subr.mxu0 0.0
    %107 = vmatpush1.msra.mxu0 0.0
    %108 = vmatprep.subr.mxu0 0.0
    %109 = vmatpush1.msra.mxu0 0.0
    %110 = vmatprep.subr.mxu0 0.0
    %111 = vmatpush1.msra.mxu0 0.0
    %112 = vmatprep.subr.mxu0 0.0
    %113 = vmatpush1.msra.mxu0 0.0
    %114 = vmatprep.subr.mxu0 0.0
    %115 = vmatpush1.msra.mxu0 0.0
    %116 = vmatprep.subr.mxu0 0.0
    %117 = vmatpush1.msra.mxu0 0.0
    %118 = vmatprep.subr.mxu0 0.0
    %119 = vmatpush1.msra.mxu0 0.0
    %120 = vmatprep.subr.mxu0 0.0
    %121 = vmatpush1.msra.mxu0 0.0
    %122 = vmatprep.subr.mxu0 0.0
    %123 = vmatpush1.msra.mxu0 0.0
    %124 = vmatprep.subr.mxu0 0.0
    %125 = vmatpush1.msra.mxu0 0.0
    %126 = vmatprep.mubr.f32.mxu0 0.0
    %127 = vmatmul.mubr.f32.gmra.mrb[0].mxu0 %v60
    %v128 = vpop.f32.mrb[0].mxu0
    %v129 = vadd.f32 %v56, %v128
    %v130 = vpop.f32.mrb[0].mxu0
    %131 = vdwg.mxu0
    %v132 = vmax.f32 %v129, 0.0
    %v133 = vld [vmem:[%s4] sm:$0x1]
    %v135 = vlaneseq
    %v136 = vshrl.u32 %v135, 7
    %v137 = vsub.s32 0, %v136
    %v138 = vrot.slane %v133, %v137
    %vm140 = vcmask 261120
    %v142 = vsel %vm140, %v132, 0
    %144 = vmatprep.subr.mxu0 0.0
    %145 = vmatpush1.msra.mxu0 %v43
    %146 = vmatprep.subr.mxu0 0.0
    %147 = vmatpush1.msra.mxu0 %v44
    %148 = vmatprep.subr.mxu0 0.0
    %149 = vmatpush1.msra.mxu0 %v45
    %150 = vmatprep.subr.mxu0 0.0
    %151 = vmatpush1.msra.mxu0 %v46
    %152 = vmatprep.subr.mxu0 0.0
    %153 = vmatpush1.msra.mxu0 0.0
    %154 = vmatprep.subr.mxu0 0.0
    %155 = vmatpush1.msra.mxu0 0.0
    %156 = vmatprep.subr.mxu0 0.0
    %157 = vmatpush1.msra.mxu0 0.0
    %158 = vmatprep.subr.mxu0 0.0
    %159 = vmatpush1.msra.mxu0 0.0
    %160 = vmatprep.subr.mxu0 0.0
    %161 = vmatpush1.msra.mxu0 0.0
    %162 = vmatprep.subr.mxu0 0.0
    %163 = vmatpush1.msra.mxu0 0.0
    %164 = vmatprep.subr.mxu0 0.0
    %165 = vmatpush1.msra.mxu0 0.0
    %166 = vmatprep.subr.mxu0 0.0
    %167 = vmatpush1.msra.mxu0 0.0
    %168 = vmatprep.subr.mxu0 0.0
    %169 = vmatpush1.msra.mxu0 0.0
    %170 = vmatprep.subr.mxu0 0.0
    %171 = vmatpush1.msra.mxu0 0.0
    %172 = vmatprep.subr.mxu0 0.0
    %173 = vmatpush1.msra.mxu0 0.0
    %174 = vmatprep.subr.mxu0 0.0
    %175 = vmatpush1.msra.mxu0 0.0
    %176 = vmatprep.subr.mxu0 0.0
    %177 = vmatpush1.msra.mxu0 0.0
    %178 = vmatprep.subr.mxu0 0.0
    %179 = vmatpush1.msra.mxu0 0.0
    %180 = vmatprep.subr.mxu0 0.0
    %181 = vmatpush1.msra.mxu0 0.0
    %182 = vmatprep.subr.mxu0 0.0
    %183 = vmatpush1.msra.mxu0 0.0
    %184 = vmatprep.subr.mxu0 0.0
    %185 = vmatpush1.msra.mxu0 0.0
    %186 = vmatprep.subr.mxu0 0.0
    %187 = vmatpush1.msra.mxu0 0.0
    %188 = vmatprep.subr.mxu0 0.0
    %189 = vmatpush1.msra.mxu0 0.0
    %190 = vmatprep.subr.mxu0 0.0
    %191 = vmatpush1.msra.mxu0 0.0
    %192 = vmatprep.subr.mxu0 0.0
    %193 = vmatpush1.msra.mxu0 0.0
    %194 = vmatprep.subr.mxu0 0.0
    %195 = vmatpush1.msra.mxu0 0.0
    %196 = vmatprep.subr.mxu0 0.0
    %197 = vmatpush1.msra.mxu0 0.0
    %198 = vmatprep.subr.mxu0 0.0
    %199 = vmatpush1.msra.mxu0 0.0
    %200 = vmatprep.subr.mxu0 0.0
    %201 = vmatpush1.msra.mxu0 0.0
    %202 = vmatprep.subr.mxu0 0.0
    %203 = vmatpush1.msra.mxu0 0.0
    %204 = vmatprep.subr.mxu0 0.0
    %205 = vmatpush1.msra.mxu0 0.0
    %206 = vmatprep.subr.mxu0 0.0
    %207 = vmatpush1.msra.mxu0 0.0
    %208 = vmatprep.mubr.f32.mxu0 0.0
    %209 = vmatmul.mubr.f32.gmra.mrb[0].mxu0 %v142
    %v210 = vpop.f32.mrb[0].mxu0
    %v211 = vadd.f32 %v138, %v210
    %v212 = vpop.f32.mrb[0].mxu0
    %213 = vdwg.mxu0
    %v214 = vmax.f32 %v211, 0.0
    %v215 = vld [vmem:[%s6] sm:$0x1]
    %v217 = vlaneseq
    %v218 = vshrl.u32 %v217, 7
    %v219 = vsub.s32 0, %v218
    %v220 = vrot.slane %v215, %v219
    %v223 = vsel %vm140, %v214, 0
    %225 = vmatprep.subr.mxu0 0.0
    %226 = vmatpush1.msra.mxu0 %v47
    %227 = vmatprep.subr.mxu0 0.0
    %228 = vmatpush1.msra.mxu0 %v48
    %229 = vmatprep.subr.mxu0 0.0
    %230 = vmatpush1.msra.mxu0 %v49
    %231 = vmatprep.subr.mxu0 0.0
    %232 = vmatpush1.msra.mxu0 %v50
    %233 = vmatprep.subr.mxu0 0.0
    %234 = vmatpush1.msra.mxu0 0.0
    %235 = vmatprep.subr.mxu0 0.0
    %236 = vmatpush1.msra.mxu0 0.0
    %237 = vmatprep.subr.mxu0 0.0
    %238 = vmatpush1.msra.mxu0 0.0
    %239 = vmatprep.subr.mxu0 0.0
    %240 = vmatpush1.msra.mxu0 0.0
    %241 = vmatprep.subr.mxu0 0.0
    %242 = vmatpush1.msra.mxu0 0.0
    %243 = vmatprep.subr.mxu0 0.0
    %244 = vmatpush1.msra.mxu0 0.0
    %245 = vmatprep.subr.mxu0 0.0
    %246 = vmatpush1.msra.mxu0 0.0
    %247 = vmatprep.subr.mxu0 0.0
    %248 = vmatpush1.msra.mxu0 0.0
    %249 = vmatprep.subr.mxu0 0.0
    %250 = vmatpush1.msra.mxu0 0.0
    %251 = vmatprep.subr.mxu0 0.0
    %252 = vmatpush1.msra.mxu0 0.0
    %253 = vmatprep.subr.mxu0 0.0
    %254 = vmatpush1.msra.mxu0 0.0
    %255 = vmatprep.subr.mxu0 0.0
    %256 = vmatpush1.msra.mxu0 0.0
    %257 = vmatprep.subr.mxu0 0.0
    %258 = vmatpush1.msra.mxu0 0.0
    %259 = vmatprep.subr.mxu0 0.0
    %260 = vmatpush1.msra.mxu0 0.0
    %261 = vmatprep.subr.mxu0 0.0
    %262 = vmatpush1.msra.mxu0 0.0
    %263 = vmatprep.subr.mxu0 0.0
    %264 = vmatpush1.msra.mxu0 0.0
    %265 = vmatprep.subr.mxu0 0.0
    %266 = vmatpush1.msra.mxu0 0.0
    %267 = vmatprep.subr.mxu0 0.0
    %268 = vmatpush1.msra.mxu0 0.0
    %269 = vmatprep.subr.mxu0 0.0
    %270 = vmatpush1.msra.mxu0 0.0
    %271 = vmatprep.subr.mxu0 0.0
    %272 = vmatpush1.msra.mxu0 0.0
    %273 = vmatprep.subr.mxu0 0.0
    %274 = vmatpush1.msra.mxu0 0.0
    %275 = vmatprep.subr.mxu0 0.0
    %276 = vmatpush1.msra.mxu0 0.0
    %277 = vmatprep.subr.mxu0 0.0
    %278 = vmatpush1.msra.mxu0 0.0
    %279 = vmatprep.subr.mxu0 0.0
    %280 = vmatpush1.msra.mxu0 0.0
    %281 = vmatprep.subr.mxu0 0.0
    %282 = vmatpush1.msra.mxu0 0.0
    %283 = vmatprep.subr.mxu0 0.0
    %284 = vmatpush1.msra.mxu0 0.0
    %285 = vmatprep.subr.mxu0 0.0
    %286 = vmatpush1.msra.mxu0 0.0
    %287 = vmatprep.subr.mxu0 0.0
    %288 = vmatpush1.msra.mxu0 0.0
    %289 = vmatprep.mubr.f32.mxu0 0.0
    %290 = vmatmul.mubr.f32.gmra.mrb[0].mxu0 %v223
    %v291 = vpop.f32.mrb[0].mxu0
    %v292 = vadd.f32 %v220, %v291
    %v293 = vpop.f32.mrb[0].mxu0
    %294 = vdwg.mxu0
    %vm295 = vcmask 31744
    %296 = vst.msk [vmem:[%s7] sm:$0xff] %vm295, %v292
    // Predicated region
    $region34: #{tpu_custom_call.1} parent=1 // pred_check
      _
    $region35: #{tpu_custom_call.1} parent=1 // pred_check_branch
      %298 = sbr.rel (0) target = $region37
    $region36: #{tpu_custom_call.1} parent=1 // pred_region
      _
    $region37: #{tpu_custom_call.1} parent=1 // pred_fallthru
      _
    // Predicated region
    $region38: #{tpu_custom_call.1} parent=1 // pred_check
      _
    $region39: #{tpu_custom_call.1} parent=1 // pred_check_branch
      %300 = sbr.rel (0) target = $region41
    $region40: #{tpu_custom_call.1} parent=1 // pred_region
      _
    $region41: #{tpu_custom_call.1} parent=1 // pred_fallthru
      _
    %301 = vsyncpa [#allocation3], 1

</llo_original>
